<compile_context>
chip_gen: v7x
topology: tpu7x:2x2x1
jax: 0.10.0
libtpu: 0.0.40
codegen_flags: <defaults>
</compile_context>

<pallas_src>
import math
import functools

import jax
import jax.numpy as jnp
from jax.experimental import pallas as pl
from jax.experimental.pallas import tpu as pltpu


def _round_up(x, m):
    return ((x + m - 1) // m) * m


def actor_forward_kernel(x_ref, w1_ref, b1_ref, w2_ref, b2_ref,
                         wmu_ref, bmu_ref, wls_ref, bls_ref,
                         mu_ref, std_ref):
    """One batch tile of the fused MLP (2 hidden layers + split mu/log_std head)."""
    x = x_ref[...]

    # hidden layer 1: relu(x @ W1 + b1)   (fp32 MXU accumulate)
    h1 = jnp.dot(x, w1_ref[...], preferred_element_type=jnp.float32) + b1_ref[...]
    h1 = jnp.maximum(h1, 0.0)

    # hidden layer 2: relu(h1 @ W2 + b2)
    h2 = jnp.dot(h1, w2_ref[...], preferred_element_type=jnp.float32) + b2_ref[...]
    h2 = jnp.maximum(h2, 0.0)

    # split head: mu and log_std written directly (no in-kernel lane slice)
    mu = jnp.dot(h2, wmu_ref[...], preferred_element_type=jnp.float32) + bmu_ref[...]
    log_std = jnp.dot(h2, wls_ref[...], preferred_element_type=jnp.float32) + bls_ref[...]
    log_std = jnp.clip(log_std, -20.0, 2.0)

    mu_ref[...] = mu.astype(mu_ref.dtype)
    std_ref[...] = jnp.exp(log_std).astype(std_ref.dtype)


@functools.partial(jax.jit, static_argnames=("action_dim", "tile_b"))
def actor_forward(state, params, action_dim, tile_b=256):
    """Fused Actor.forward via one gridded pallas_call.

    `params` holds weights already transposed to (in_features, out_features)
    and biases as (1, out_features)."""
    (w1, b1), (w2, b2), (w3, b3) = params
    batch, state_dim = state.shape

    # Split the head so the kernel never slices a vreg at column `action_dim`.
    w_mu, w_ls = w3[:, :action_dim], w3[:, action_dim:]
    b_mu, b_ls = b3[:, :action_dim], b3[:, action_dim:]

    # Batch tiling: multiple of 8 sublanes, pad batch so no partial last tile.
    tile_b = min(tile_b, max(8, _round_up(batch, 8)))
    padded = _round_up(batch, tile_b)
    if padded != batch:
        state = jnp.pad(state, ((0, padded - batch), (0, 0)))
    grid = (padded // tile_b,)

    batch_map = lambda i: (i, 0)   # walk batch tiles
    const_map = lambda i: (0, 0)   # weights/biases: one DMA, VMEM-resident

    in_specs = [
        pl.BlockSpec((tile_b, state_dim), batch_map),
        pl.BlockSpec(w1.shape, const_map),
        pl.BlockSpec(b1.shape, const_map),
        pl.BlockSpec(w2.shape, const_map),
        pl.BlockSpec(b2.shape, const_map),
        pl.BlockSpec(w_mu.shape, const_map),
        pl.BlockSpec(b_mu.shape, const_map),
        pl.BlockSpec(w_ls.shape, const_map),
        pl.BlockSpec(b_ls.shape, const_map),
    ]
    out_specs = (
        pl.BlockSpec((tile_b, action_dim), batch_map),
        pl.BlockSpec((tile_b, action_dim), batch_map),
    )

    mu, std = pl.pallas_call(
        actor_forward_kernel,
        grid=grid,
        out_shape=(
            jax.ShapeDtypeStruct((padded, action_dim), jnp.float32),
            jax.ShapeDtypeStruct((padded, action_dim), jnp.float32),
        ),
        in_specs=in_specs,
        out_specs=out_specs,
        compiler_params=pltpu.CompilerParams(
            dimension_semantics=("parallel",),
        ),
    )(state, w1, b1, w2, b2, w_mu, b_mu, w_ls, b_ls)

    return mu[:batch], std[:batch]


def xavier_uniform(key, fan_in, fan_out):
    """Matches torch.nn.init.xavier_uniform_ (gain=1) for a (out,in) Linear
    weight; generated directly in the transposed (in,out) layout we use."""
    bound = math.sqrt(6.0 / (fan_in + fan_out))
    return jax.random.uniform(key, (fan_in, fan_out), jnp.float32, -bound, bound)


def init_actor_params(key, state_dim, action_dim, hidden_dim):
    dims = [state_dim] + list(hidden_dim)
    keys = jax.random.split(key, len(dims))  # one key per linear layer (incl. head)
    params = []
    for i, (d_in, d_out) in enumerate(zip(dims[:-1], dims[1:])):
        w = xavier_uniform(keys[i], d_in, d_out)
        b = jnp.zeros((1, d_out), jnp.float32)     # constant_(bias, 0)
        params.append((w, b))
    w = xavier_uniform(keys[-1], dims[-1], 2 * action_dim)
    b = jnp.zeros((1, 2 * action_dim), jnp.float32)
    params.append((w, b))
    return params


def reference_forward(state, params, action_dim):
    """Pure-JAX reference mirroring the PyTorch forward."""
    (w1, b1), (w2, b2), (w3, b3) = params
    x = jnp.maximum(state @ w1 + b1, 0.0)
    x = jnp.maximum(x @ w2 + b2, 0.0)
    out = x @ w3 + b3
    mu = out[:, :action_dim]
    std = jnp.exp(jnp.clip(out[:, action_dim:], -20.0, 2.0))
    return mu, std


if __name__ == "__main__":
    # Small shapes consistent with the module: state -> [hidden, hidden] -> 2*action_dim
    state_dim = 8
    action_dim = 4
    hidden_dim = [32, 32]

    key = jax.random.PRNGKey(0)
    k_params, k_state1, k_state2 = jax.random.split(key, 3)
    params = init_actor_params(k_params, state_dim, action_dim, hidden_dim)

    # Case 1: single tile (batch=8).
    state = jax.random.normal(k_state1, (8, state_dim), jnp.float32)
    mu, std = actor_forward(state, params, action_dim)
    jax.block_until_ready((mu, std))
    mu_ref, std_ref = reference_forward(state, params, action_dim)
    assert mu.shape == (8, action_dim) and std.shape == (8, action_dim)
    assert jnp.allclose(mu, mu_ref, atol=1e-5, rtol=1e-5)
    assert jnp.allclose(std, std_ref, atol=1e-5, rtol=1e-5)
    assert bool(jnp.all(std > 0.0))

    # Case 2: exercise the batch grid + padding path (batch=20, tile_b=8 -> 3 tiles).
    state2 = jax.random.normal(k_state2, (20, state_dim), jnp.float32)
    mu2, std2 = actor_forward(state2, params, action_dim, tile_b=8)
    jax.block_until_ready((mu2, std2))
    mu2_ref, std2_ref = reference_forward(state2, params, action_dim)
    assert mu2.shape == (20, action_dim) and std2.shape == (20, action_dim)
    assert jnp.allclose(mu2, mu2_ref, atol=1e-5, rtol=1e-5)
    assert jnp.allclose(std2, std2_ref, atol=1e-5, rtol=1e-5)

    print("KERNEL_OK")
</pallas_src>

<mosaic_0001>
module attributes {stable_mosaic.version = 11 : i64} {
  func.func @actor_forward_kernel(%arg0: i32, %arg1: memref<8x8xf32, #tpu.memory_space<vmem>>, %arg2: memref<8x32xf32, #tpu.memory_space<vmem>>, %arg3: memref<1x32xf32, #tpu.memory_space<vmem>>, %arg4: memref<32x32xf32, #tpu.memory_space<vmem>>, %arg5: memref<1x32xf32, #tpu.memory_space<vmem>>, %arg6: memref<32x4xf32, #tpu.memory_space<vmem>>, %arg7: memref<1x4xf32, #tpu.memory_space<vmem>>, %arg8: memref<32x4xf32, #tpu.memory_space<vmem>>, %arg9: memref<1x4xf32, #tpu.memory_space<vmem>>, %arg10: memref<8x4xf32, #tpu.memory_space<vmem>>, %arg11: memref<8x4xf32, #tpu.memory_space<vmem>>) attributes {dimension_semantics = [#tpu.dimension_semantics<parallel>], iteration_bounds = array<i64: 1>, scalar_prefetch = 0 : i64, scratch_operands = 0 : i64, tpu.core_type = #tpu.core_type<tc>, window_params = [{transform_indices = @transform_0, window_bounds = array<i64: 8, 8>}, {pipeline_mode = #tpu.pipeline_mode<synchronous>, transform_indices = @transform_1, window_bounds = array<i64: 8, 32>}, {pipeline_mode = #tpu.pipeline_mode<synchronous>, transform_indices = @transform_2, window_bounds = array<i64: 1, 32>}, {pipeline_mode = #tpu.pipeline_mode<synchronous>, transform_indices = @transform_3, window_bounds = array<i64: 32, 32>}, {pipeline_mode = #tpu.pipeline_mode<synchronous>, transform_indices = @transform_4, window_bounds = array<i64: 1, 32>}, {pipeline_mode = #tpu.pipeline_mode<synchronous>, transform_indices = @transform_5, window_bounds = array<i64: 32, 4>}, {pipeline_mode = #tpu.pipeline_mode<synchronous>, transform_indices = @transform_6, window_bounds = array<i64: 1, 4>}, {pipeline_mode = #tpu.pipeline_mode<synchronous>, transform_indices = @transform_7, window_bounds = array<i64: 32, 4>}, {pipeline_mode = #tpu.pipeline_mode<synchronous>, transform_indices = @transform_8, window_bounds = array<i64: 1, 4>}, {transform_indices = @transform_9, window_bounds = array<i64: 8, 4>}, {transform_indices = @transform_10, window_bounds = array<i64: 8, 4>}]} {
    %c0 = arith.constant 0 : index
    %c0_0 = arith.constant 0 : index
    %0 = vector.load %arg1[%c0, %c0_0] : memref<8x8xf32, #tpu.memory_space<vmem>>, vector<8x8xf32>
    %c0_1 = arith.constant 0 : index
    %c0_2 = arith.constant 0 : index
    %1 = vector.load %arg2[%c0_1, %c0_2] : memref<8x32xf32, #tpu.memory_space<vmem>>, vector<8x32xf32>
    %cst = arith.constant dense<0.000000e+00> : vector<8x32xf32>
    %2 = tpu.matmul %0, %1, %cst {dimension_numbers = #tpu.dot_dimension_numbers<[1], [0], [0], [1], [0, 0, 1, 1], [], []>} : vector<8x8xf32>, vector<8x32xf32>, vector<8x32xf32> -> vector<8x32xf32>
    %c0_3 = arith.constant 0 : index
    %c0_4 = arith.constant 0 : index
    %3 = vector.load %arg3[%c0_3, %c0_4] : memref<1x32xf32, #tpu.memory_space<vmem>>, vector<1x32xf32>
    %4 = vector.broadcast %3 : vector<1x32xf32> to vector<8x32xf32>
    %5 = arith.addf %2, %4 : vector<8x32xf32>
    %cst_5 = arith.constant 0.000000e+00 : f32
    %6 = vector.broadcast %cst_5 : f32 to vector<8x32xf32>
    %7 = arith.maximumf %5, %6 : vector<8x32xf32>
    %c0_6 = arith.constant 0 : index
    %c0_7 = arith.constant 0 : index
    %8 = vector.load %arg4[%c0_6, %c0_7] : memref<32x32xf32, #tpu.memory_space<vmem>>, vector<32x32xf32>
    %cst_8 = arith.constant dense<0.000000e+00> : vector<8x32xf32>
    %9 = tpu.matmul %7, %8, %cst_8 {dimension_numbers = #tpu.dot_dimension_numbers<[1], [0], [0], [1], [0, 0, 1, 1], [], []>} : vector<8x32xf32>, vector<32x32xf32>, vector<8x32xf32> -> vector<8x32xf32>
    %c0_9 = arith.constant 0 : index
    %c0_10 = arith.constant 0 : index
    %10 = vector.load %arg5[%c0_9, %c0_10] : memref<1x32xf32, #tpu.memory_space<vmem>>, vector<1x32xf32>
    %11 = vector.broadcast %10 : vector<1x32xf32> to vector<8x32xf32>
    %12 = arith.addf %9, %11 : vector<8x32xf32>
    %cst_11 = arith.constant 0.000000e+00 : f32
    %13 = vector.broadcast %cst_11 : f32 to vector<8x32xf32>
    %14 = arith.maximumf %12, %13 : vector<8x32xf32>
    %c0_12 = arith.constant 0 : index
    %c0_13 = arith.constant 0 : index
    %15 = vector.load %arg6[%c0_12, %c0_13] : memref<32x4xf32, #tpu.memory_space<vmem>>, vector<32x4xf32>
    %cst_14 = arith.constant dense<0.000000e+00> : vector<8x4xf32>
    %16 = tpu.matmul %14, %15, %cst_14 {dimension_numbers = #tpu.dot_dimension_numbers<[1], [0], [0], [1], [0, 0, 1, 1], [], []>} : vector<8x32xf32>, vector<32x4xf32>, vector<8x4xf32> -> vector<8x4xf32>
    %c0_15 = arith.constant 0 : index
    %c0_16 = arith.constant 0 : index
    %17 = vector.load %arg7[%c0_15, %c0_16] : memref<1x4xf32, #tpu.memory_space<vmem>>, vector<1x4xf32>
    %18 = vector.broadcast %17 : vector<1x4xf32> to vector<8x4xf32>
    %19 = arith.addf %16, %18 : vector<8x4xf32>
    %c0_17 = arith.constant 0 : index
    %c0_18 = arith.constant 0 : index
    %20 = vector.load %arg8[%c0_17, %c0_18] : memref<32x4xf32, #tpu.memory_space<vmem>>, vector<32x4xf32>
    %cst_19 = arith.constant dense<0.000000e+00> : vector<8x4xf32>
    %21 = tpu.matmul %14, %20, %cst_19 {dimension_numbers = #tpu.dot_dimension_numbers<[1], [0], [0], [1], [0, 0, 1, 1], [], []>} : vector<8x32xf32>, vector<32x4xf32>, vector<8x4xf32> -> vector<8x4xf32>
    %c0_20 = arith.constant 0 : index
    %c0_21 = arith.constant 0 : index
    %22 = vector.load %arg9[%c0_20, %c0_21] : memref<1x4xf32, #tpu.memory_space<vmem>>, vector<1x4xf32>
    %23 = vector.broadcast %22 : vector<1x4xf32> to vector<8x4xf32>
    %24 = arith.addf %21, %23 : vector<8x4xf32>
    %cst_22 = arith.constant -2.000000e+01 : f32
    %cst_23 = arith.constant 2.000000e+00 : f32
    %25 = vector.broadcast %cst_22 : f32 to vector<8x4xf32>
    %26 = arith.maximumf %25, %24 : vector<8x4xf32>
    %27 = vector.broadcast %cst_23 : f32 to vector<8x4xf32>
    %28 = arith.minimumf %27, %26 : vector<8x4xf32>
    %c0_24 = arith.constant 0 : index
    %c0_25 = arith.constant 0 : index
    %29 = vector.load %arg10[%c0_24, %c0_25] : memref<8x4xf32, #tpu.memory_space<vmem>>, vector<8x4xf32>
    tpu.vector_store %arg10[%c0_24, %c0_25], %19 {strides = array<i32>} : memref<8x4xf32, #tpu.memory_space<vmem>>, vector<8x4xf32>,
    %30 = math.exp %28 : vector<8x4xf32>
    %c0_26 = arith.constant 0 : index
    %c0_27 = arith.constant 0 : index
    %31 = vector.load %arg11[%c0_26, %c0_27] : memref<8x4xf32, #tpu.memory_space<vmem>>, vector<8x4xf32>
    tpu.vector_store %arg11[%c0_26, %c0_27], %30 {strides = array<i32>} : memref<8x4xf32, #tpu.memory_space<vmem>>, vector<8x4xf32>,
    return
  }
  func.func @transform_0(%arg0: i32) -> (i32, i32) {
    %c0_i32 = arith.constant 0 : i32
    %c0_i32_0 = arith.constant 0 : i32
    return %arg0, %c0_i32 : i32, i32
  }
  func.func @transform_1(%arg0: i32) -> (i32, i32) {
    %c0_i32 = arith.constant 0 : i32
    %c0_i32_0 = arith.constant 0 : i32
    %c0_i32_1 = arith.constant 0 : i32
    return %c0_i32, %c0_i32_0 : i32, i32
  }
  func.func @transform_2(%arg0: i32) -> (i32, i32) {
    %c0_i32 = arith.constant 0 : i32
    %c0_i32_0 = arith.constant 0 : i32
    %c0_i32_1 = arith.constant 0 : i32
    return %c0_i32, %c0_i32_0 : i32, i32
  }
  func.func @transform_3(%arg0: i32) -> (i32, i32) {
    %c0_i32 = arith.constant 0 : i32
    %c0_i32_0 = arith.constant 0 : i32
    %c0_i32_1 = arith.constant 0 : i32
    return %c0_i32, %c0_i32_0 : i32, i32
  }
  func.func @transform_4(%arg0: i32) -> (i32, i32) {
    %c0_i32 = arith.constant 0 : i32
    %c0_i32_0 = arith.constant 0 : i32
    %c0_i32_1 = arith.constant 0 : i32
    return %c0_i32, %c0_i32_0 : i32, i32
  }
  func.func @transform_5(%arg0: i32) -> (i32, i32) {
    %c0_i32 = arith.constant 0 : i32
    %c0_i32_0 = arith.constant 0 : i32
    %c0_i32_1 = arith.constant 0 : i32
    return %c0_i32, %c0_i32_0 : i32, i32
  }
  func.func @transform_6(%arg0: i32) -> (i32, i32) {
    %c0_i32 = arith.constant 0 : i32
    %c0_i32_0 = arith.constant 0 : i32
    %c0_i32_1 = arith.constant 0 : i32
    return %c0_i32, %c0_i32_0 : i32, i32
  }
  func.func @transform_7(%arg0: i32) -> (i32, i32) {
    %c0_i32 = arith.constant 0 : i32
    %c0_i32_0 = arith.constant 0 : i32
    %c0_i32_1 = arith.constant 0 : i32
    return %c0_i32, %c0_i32_0 : i32, i32
  }
  func.func @transform_8(%arg0: i32) -> (i32, i32) {
    %c0_i32 = arith.constant 0 : i32
    %c0_i32_0 = arith.constant 0 : i32
    %c0_i32_1 = arith.constant 0 : i32
    return %c0_i32, %c0_i32_0 : i32, i32
  }
  func.func @transform_9(%arg0: i32) -> (i32, i32) {
    %c0_i32 = arith.constant 0 : i32
    %c0_i32_0 = arith.constant 0 : i32
    return %arg0, %c0_i32 : i32, i32
  }
  func.func @transform_10(%arg0: i32) -> (i32, i32) {
    %c0_i32 = arith.constant 0 : i32
    %c0_i32_0 = arith.constant 0 : i32
    return %arg0, %c0_i32 : i32, i32
  }
}

</mosaic_0001>

<llo_original>
// kernel: actor_forward.1
$region0: #{actor_forward.1}
  #allocation0 [shape = 'u32[]', space=smem, size = 0x4, offset = 0x4, fixed_abs, tag = 'smem constant byte address 0x4 - core index']
  #allocation1 [shape = 'u32[144,128]{1,0:T(1,128)}', space=vmem, size = 0x12000, scoped, tag = 'internal scratch']
  %s0 = inlined_call_operand.vmem [shape: f32[8,8], index: 0, kind: input, shape index: {}]
  %s1 = inlined_call_operand.vmem [shape: f32[8,32], index: 1, kind: input, shape index: {}]
  %s2 = inlined_call_operand.vmem [shape: f32[1,32], index: 2, kind: input, shape index: {}]
  %s3 = inlined_call_operand.vmem [shape: f32[32,32], index: 3, kind: input, shape index: {}]
  %s4 = inlined_call_operand.vmem [shape: f32[1,32], index: 4, kind: input, shape index: {}]
  %s5 = inlined_call_operand.vmem [shape: f32[32,4], index: 5, kind: input, shape index: {}]
  %s6 = inlined_call_operand.vmem [shape: f32[1,4], index: 6, kind: input, shape index: {}]
  %s7 = inlined_call_operand.vmem [shape: f32[32,4], index: 7, kind: input, shape index: {}]
  %s8 = inlined_call_operand.vmem [shape: f32[1,4], index: 8, kind: input, shape index: {}]
  %s9 = inlined_call_operand.vmem [shape: f32[8,4], index: 9, kind: output, shape index: {0}]
  %s10 = inlined_call_operand.vmem [shape: f32[8,4], index: 10, kind: output, shape index: {1}]
  %11 = xla_tuple %s9, %s10
  %s12 = sld [smem:[#allocation0]]
  $region54: #{actor_forward.1} parent=0
    _
  %s14 = ssub.s32 1, %s12
  %s15 = scalar_select 0, %s14, %s12
  // Predicated region
  $region2: #{actor_forward.1} parent=0 // pred_check
    _
  $region3: #{actor_forward.1} parent=0 // pred_check_branch
    %17 = sbr.rel (0) target = $region5
  $region4: #{actor_forward.1} parent=0 // pred_region
    _
  $region5: #{actor_forward.1} parent=0 // pred_fallthru
    _
  // Predicated region
  $region6: #{actor_forward.1} parent=0 // pred_check
    _
  $region7: #{actor_forward.1} parent=0 // pred_check_branch
    %19 = sbr.rel (0) target = $region9
  $region8: #{actor_forward.1} parent=0 // pred_region
    _
  $region9: #{actor_forward.1} parent=0 // pred_fallthru
    _
  // Predicated region
  $region10: #{actor_forward.1} parent=0 // pred_check
    _
  $region11: #{actor_forward.1} parent=0 // pred_check_branch
    %21 = sbr.rel (0) target = $region13
  $region12: #{actor_forward.1} parent=0 // pred_region
    _
  $region13: #{actor_forward.1} parent=0 // pred_fallthru
    _
  // Predicated region
  $region14: #{actor_forward.1} parent=0 // pred_check
    _
  $region15: #{actor_forward.1} parent=0 // pred_check_branch
    %23 = sbr.rel (0) target = $region17
  $region16: #{actor_forward.1} parent=0 // pred_region
    _
  $region17: #{actor_forward.1} parent=0 // pred_fallthru
    _
  // Predicated region
  $region18: #{actor_forward.1} parent=0 // pred_check
    _
  $region19: #{actor_forward.1} parent=0 // pred_check_branch
    %25 = sbr.rel (0) target = $region21
  $region20: #{actor_forward.1} parent=0 // pred_region
    _
  $region21: #{actor_forward.1} parent=0 // pred_fallthru
    _
  // Predicated region
  $region22: #{actor_forward.1} parent=0 // pred_check
    _
  $region23: #{actor_forward.1} parent=0 // pred_check_branch
    %27 = sbr.rel (0) target = $region25
  $region24: #{actor_forward.1} parent=0 // pred_region
    _
  $region25: #{actor_forward.1} parent=0 // pred_fallthru
    _
  // Predicated region
  $region26: #{actor_forward.1} parent=0 // pred_check
    _
  $region27: #{actor_forward.1} parent=0 // pred_check_branch
    %29 = sbr.rel (0) target = $region29
  $region28: #{actor_forward.1} parent=0 // pred_region
    _
  $region29: #{actor_forward.1} parent=0 // pred_fallthru
    _
  // Predicated region
  $region30: #{actor_forward.1} parent=0 // pred_check
    _
  $region31: #{actor_forward.1} parent=0 // pred_check_branch
    %31 = sbr.rel (0) target = $region33
  $region32: #{actor_forward.1} parent=0 // pred_region
    _
  $region33: #{actor_forward.1} parent=0 // pred_fallthru
    _
  // Predicated region
  $region34: #{actor_forward.1} parent=0 // pred_check
    _
  $region35: #{actor_forward.1} parent=0 // pred_check_branch
    %33 = sbr.rel (0) target = $region37
  $region36: #{actor_forward.1} parent=0 // pred_region
    _
  $region37: #{actor_forward.1} parent=0 // pred_fallthru
    _
  %v34 = vld [vmem:[%s0] sm:$0xff]
  %v35 = vld [vmem:[%s1] sm:$0xff]
  %v36 = vld [vmem:[%s2] sm:$0x1]
  %v38 = vlaneseq
  %v39 = vshrl.u32 %v38, 7
  %v40 = vsub.s32 0, %v39
  %v41 = vrot.slane %v36, %v40
  %vm43 = vcmask 64512
  %v45 = vsel %vm43, %v34, 0
  %47 = vmatprep.subr.mxu0 0.0
  %48 = vmatpush1.msra.mxu0 %v35
  %49 = vmatprep.subr.mxu0 0.0
  %50 = vmatpush1.msra.mxu0 0.0
  %51 = vmatprep.subr.mxu0 0.0
  %52 = vmatpush1.msra.mxu0 0.0
  %53 = vmatprep.subr.mxu0 0.0
  %54 = vmatpush1.msra.mxu0 0.0
  %55 = vmatprep.subr.mxu0 0.0
  %56 = vmatpush1.msra.mxu0 0.0
  %57 = vmatprep.subr.mxu0 0.0
  %58 = vmatpush1.msra.mxu0 0.0
  %59 = vmatprep.subr.mxu0 0.0
  %60 = vmatpush1.msra.mxu0 0.0
  %61 = vmatprep.subr.mxu0 0.0
  %62 = vmatpush1.msra.mxu0 0.0
  %63 = vmatprep.subr.mxu0 0.0
  %64 = vmatpush1.msra.mxu0 0.0
  %65 = vmatprep.subr.mxu0 0.0
  %66 = vmatpush1.msra.mxu0 0.0
  %67 = vmatprep.subr.mxu0 0.0
  %68 = vmatpush1.msra.mxu0 0.0
  %69 = vmatprep.subr.mxu0 0.0
  %70 = vmatpush1.msra.mxu0 0.0
  %71 = vmatprep.subr.mxu0 0.0
  %72 = vmatpush1.msra.mxu0 0.0
  %73 = vmatprep.subr.mxu0 0.0
  %74 = vmatpush1.msra.mxu0 0.0
  %75 = vmatprep.subr.mxu0 0.0
  %76 = vmatpush1.msra.mxu0 0.0
  %77 = vmatprep.subr.mxu0 0.0
  %78 = vmatpush1.msra.mxu0 0.0
  %79 = vmatprep.subr.mxu0 0.0
  %80 = vmatpush1.msra.mxu0 0.0
  %81 = vmatprep.subr.mxu0 0.0
  %82 = vmatpush1.msra.mxu0 0.0
  %83 = vmatprep.subr.mxu0 0.0
  %84 = vmatpush1.msra.mxu0 0.0
  %85 = vmatprep.subr.mxu0 0.0
  %86 = vmatpush1.msra.mxu0 0.0
  %87 = vmatprep.subr.mxu0 0.0
  %88 = vmatpush1.msra.mxu0 0.0
  %89 = vmatprep.subr.mxu0 0.0
  %90 = vmatpush1.msra.mxu0 0.0
  %91 = vmatprep.subr.mxu0 0.0
  %92 = vmatpush1.msra.mxu0 0.0
  %93 = vmatprep.subr.mxu0 0.0
  %94 = vmatpush1.msra.mxu0 0.0
  %95 = vmatprep.subr.mxu0 0.0
  %96 = vmatpush1.msra.mxu0 0.0
  %97 = vmatprep.subr.mxu0 0.0
  %98 = vmatpush1.msra.mxu0 0.0
  %99 = vmatprep.subr.mxu0 0.0
  %100 = vmatpush1.msra.mxu0 0.0
  %101 = vmatprep.subr.mxu0 0.0
  %102 = vmatpush1.msra.mxu0 0.0
  %103 = vmatprep.subr.mxu0 0.0
  %104 = vmatpush1.msra.mxu0 0.0
  %105 = vmatprep.subr.mxu0 0.0
  %106 = vmatpush1.msra.mxu0 0.0
  %107 = vmatprep.subr.mxu0 0.0
  %108 = vmatpush1.msra.mxu0 0.0
  %109 = vmatprep.subr.mxu0 0.0
  %110 = vmatpush1.msra.mxu0 0.0
  %111 = vmatprep.mubr.f32.mxu0 0.0
  %112 = vmatmul.mubr.f32.gmra.mrb[0].mxu0 %v45
  %v113 = vpop.f32.mrb[0].mxu0
  %v114 = vadd.f32 %v41, %v113
  %v115 = vpop.f32.mrb[0].mxu0
  %116 = vdwg.mxu0
  %v117 = vmax.f32 %v114, 0.0
  %v118 = vld [vmem:[%s3] sm:$0xff]
  %v119 = vld [vmem:[%s3 + $0x8] sm:$0xff]
  %v120 = vld [vmem:[%s3 + $0x10] sm:$0xff]
  %v121 = vld [vmem:[%s3 + $0x18] sm:$0xff]
  %v122 = vld [vmem:[%s4] sm:$0x1]
  %v124 = vlaneseq
  %v125 = vshrl.u32 %v124, 7
  %v126 = vsub.s32 0, %v125
  %v127 = vrot.slane %v122, %v126
  %vm129 = vcmask 261120
  %v131 = vsel %vm129, %v117, 0
  %133 = vmatprep.subr.mxu0 0.0
  %134 = vmatpush1.msra.mxu0 %v118
  %135 = vmatprep.subr.mxu0 0.0
  %136 = vmatpush1.msra.mxu0 %v119
  %137 = vmatprep.subr.mxu0 0.0
  %138 = vmatpush1.msra.mxu0 %v120
  %139 = vmatprep.subr.mxu0 0.0
  %140 = vmatpush1.msra.mxu0 %v121
  %141 = vmatprep.subr.mxu0 0.0
  %142 = vmatpush1.msra.mxu0 0.0
  %143 = vmatprep.subr.mxu0 0.0
  %144 = vmatpush1.msra.mxu0 0.0
  %145 = vmatprep.subr.mxu0 0.0
  %146 = vmatpush1.msra.mxu0 0.0
  %147 = vmatprep.subr.mxu0 0.0
  %148 = vmatpush1.msra.mxu0 0.0
  %149 = vmatprep.subr.mxu0 0.0
  %150 = vmatpush1.msra.mxu0 0.0
  %151 = vmatprep.subr.mxu0 0.0
  %152 = vmatpush1.msra.mxu0 0.0
  %153 = vmatprep.subr.mxu0 0.0
  %154 = vmatpush1.msra.mxu0 0.0
  %155 = vmatprep.subr.mxu0 0.0
  %156 = vmatpush1.msra.mxu0 0.0
  %157 = vmatprep.subr.mxu0 0.0
  %158 = vmatpush1.msra.mxu0 0.0
  %159 = vmatprep.subr.mxu0 0.0
  %160 = vmatpush1.msra.mxu0 0.0
  %161 = vmatprep.subr.mxu0 0.0
  %162 = vmatpush1.msra.mxu0 0.0
  %163 = vmatprep.subr.mxu0 0.0
  %164 = vmatpush1.msra.mxu0 0.0
  %165 = vmatprep.subr.mxu0 0.0
  %166 = vmatpush1.msra.mxu0 0.0
  %167 = vmatprep.subr.mxu0 0.0
  %168 = vmatpush1.msra.mxu0 0.0
  %169 = vmatprep.subr.mxu0 0.0
  %170 = vmatpush1.msra.mxu0 0.0
  %171 = vmatprep.subr.mxu0 0.0
  %172 = vmatpush1.msra.mxu0 0.0
  %173 = vmatprep.subr.mxu0 0.0
  %174 = vmatpush1.msra.mxu0 0.0
  %175 = vmatprep.subr.mxu0 0.0
  %176 = vmatpush1.msra.mxu0 0.0
  %177 = vmatprep.subr.mxu0 0.0
  %178 = vmatpush1.msra.mxu0 0.0
  %179 = vmatprep.subr.mxu0 0.0
  %180 = vmatpush1.msra.mxu0 0.0
  %181 = vmatprep.subr.mxu0 0.0
  %182 = vmatpush1.msra.mxu0 0.0
  %183 = vmatprep.subr.mxu0 0.0
  %184 = vmatpush1.msra.mxu0 0.0
  %185 = vmatprep.subr.mxu0 0.0
  %186 = vmatpush1.msra.mxu0 0.0
  %187 = vmatprep.subr.mxu0 0.0
  %188 = vmatpush1.msra.mxu0 0.0
  %189 = vmatprep.subr.mxu0 0.0
  %190 = vmatpush1.msra.mxu0 0.0
  %191 = vmatprep.subr.mxu0 0.0
  %192 = vmatpush1.msra.mxu0 0.0
  %193 = vmatprep.subr.mxu0 0.0
  %194 = vmatpush1.msra.mxu0 0.0
  %195 = vmatprep.subr.mxu0 0.0
  %196 = vmatpush1.msra.mxu0 0.0
  %197 = vmatprep.mubr.f32.mxu0 0.0
  %198 = vmatmul.mubr.f32.gmra.mrb[0].mxu0 %v131
  %v199 = vpop.f32.mrb[0].mxu0
  %v200 = vadd.f32 %v127, %v199
  %v201 = vpop.f32.mrb[0].mxu0
  %202 = vdwg.mxu0
  %v203 = vmax.f32 %v200, 0.0
  %v204 = vld [vmem:[%s5] sm:$0xff]
  %v205 = vld [vmem:[%s5 + $0x8] sm:$0xff]
  %v206 = vld [vmem:[%s5 + $0x10] sm:$0xff]
  %v207 = vld [vmem:[%s5 + $0x18] sm:$0xff]
  %v208 = vld [vmem:[%s6] sm:$0x1]
  %v210 = vlaneseq
  %v211 = vshrl.u32 %v210, 7
  %v212 = vsub.s32 0, %v211
  %v213 = vrot.slane %v208, %v212
  %v216 = vsel %vm129, %v203, 0
  %218 = vmatprep.subr.mxu0 0.0
  %219 = vmatpush1.msra.mxu0 %v204
  %220 = vmatprep.subr.mxu0 0.0
  %221 = vmatpush1.msra.mxu0 %v205
  %222 = vmatprep.subr.mxu0 0.0
  %223 = vmatpush1.msra.mxu0 %v206
  %224 = vmatprep.subr.mxu0 0.0
  %225 = vmatpush1.msra.mxu0 %v207
  %226 = vmatprep.subr.mxu0 0.0
  %227 = vmatpush1.msra.mxu0 0.0
  %228 = vmatprep.subr.mxu0 0.0
  %229 = vmatpush1.msra.mxu0 0.0
  %230 = vmatprep.subr.mxu0 0.0
  %231 = vmatpush1.msra.mxu0 0.0
  %232 = vmatprep.subr.mxu0 0.0
  %233 = vmatpush1.msra.mxu0 0.0
  %234 = vmatprep.subr.mxu0 0.0
  %235 = vmatpush1.msra.mxu0 0.0
  %236 = vmatprep.subr.mxu0 0.0
  %237 = vmatpush1.msra.mxu0 0.0
  %238 = vmatprep.subr.mxu0 0.0
  %239 = vmatpush1.msra.mxu0 0.0
  %240 = vmatprep.subr.mxu0 0.0
  %241 = vmatpush1.msra.mxu0 0.0
  %242 = vmatprep.subr.mxu0 0.0
  %243 = vmatpush1.msra.mxu0 0.0
  %244 = vmatprep.subr.mxu0 0.0
  %245 = vmatpush1.msra.mxu0 0.0
  %246 = vmatprep.subr.mxu0 0.0
  %247 = vmatpush1.msra.mxu0 0.0
  %248 = vmatprep.subr.mxu0 0.0
  %249 = vmatpush1.msra.mxu0 0.0
  %250 = vmatprep.subr.mxu0 0.0
  %251 = vmatpush1.msra.mxu0 0.0
  %252 = vmatprep.subr.mxu0 0.0
  %253 = vmatpush1.msra.mxu0 0.0
  %254 = vmatprep.subr.mxu0 0.0
  %255 = vmatpush1.msra.mxu0 0.0
  %256 = vmatprep.subr.mxu0 0.0
  %257 = vmatpush1.msra.mxu0 0.0
  %258 = vmatprep.subr.mxu0 0.0
  %259 = vmatpush1.msra.mxu0 0.0
  %260 = vmatprep.subr.mxu0 0.0
  %261 = vmatpush1.msra.mxu0 0.0
  %262 = vmatprep.subr.mxu0 0.0
  %263 = vmatpush1.msra.mxu0 0.0
  %264 = vmatprep.subr.mxu0 0.0
  %265 = vmatpush1.msra.mxu0 0.0
  %266 = vmatprep.subr.mxu0 0.0
  %267 = vmatpush1.msra.mxu0 0.0
  %268 = vmatprep.subr.mxu0 0.0
  %269 = vmatpush1.msra.mxu0 0.0
  %270 = vmatprep.subr.mxu0 0.0
  %271 = vmatpush1.msra.mxu0 0.0
  %272 = vmatprep.subr.mxu0 0.0
  %273 = vmatpush1.msra.mxu0 0.0
  %274 = vmatprep.subr.mxu0 0.0
  %275 = vmatpush1.msra.mxu0 0.0
  %276 = vmatprep.subr.mxu0 0.0
  %277 = vmatpush1.msra.mxu0 0.0
  %278 = vmatprep.subr.mxu0 0.0
  %279 = vmatpush1.msra.mxu0 0.0
  %280 = vmatprep.subr.mxu0 0.0
  %281 = vmatpush1.msra.mxu0 0.0
  %282 = vmatprep.mubr.f32.mxu0 0.0
  %283 = vmatmul.mubr.f32.gmra.mrb[0].mxu0 %v216
  %v284 = vpop.f32.mrb[0].mxu0
  %v285 = vadd.f32 %v213, %v284
  %v286 = vpop.f32.mrb[0].mxu0
  %287 = vdwg.mxu0
  %v288 = vld [vmem:[%s7] sm:$0xff]
  %v289 = vld [vmem:[%s7 + $0x8] sm:$0xff]
  %v290 = vld [vmem:[%s7 + $0x10] sm:$0xff]
  %v291 = vld [vmem:[%s7 + $0x18] sm:$0xff]
  %v292 = vld [vmem:[%s8] sm:$0x1]
  %v294 = vlaneseq
  %v295 = vshrl.u32 %v294, 7
  %v296 = vsub.s32 0, %v295
  %v297 = vrot.slane %v292, %v296
  %299 = vmatprep.subr.mxu0 0.0
  %300 = vmatpush1.msra.mxu0 %v288
  %301 = vmatprep.subr.mxu0 0.0
  %302 = vmatpush1.msra.mxu0 %v289
  %303 = vmatprep.subr.mxu0 0.0
  %304 = vmatpush1.msra.mxu0 %v290
  %305 = vmatprep.subr.mxu0 0.0
  %306 = vmatpush1.msra.mxu0 %v291
  %307 = vmatprep.subr.mxu0 0.0
  %308 = vmatpush1.msra.mxu0 0.0
  %309 = vmatprep.subr.mxu0 0.0
  %310 = vmatpush1.msra.mxu0 0.0
  %311 = vmatprep.subr.mxu0 0.0
  %312 = vmatpush1.msra.mxu0 0.0
  %313 = vmatprep.subr.mxu0 0.0
  %314 = vmatpush1.msra.mxu0 0.0
  %315 = vmatprep.subr.mxu0 0.0
  %316 = vmatpush1.msra.mxu0 0.0
  %317 = vmatprep.subr.mxu0 0.0
  %318 = vmatpush1.msra.mxu0 0.0
  %319 = vmatprep.subr.mxu0 0.0
  %320 = vmatpush1.msra.mxu0 0.0
  %321 = vmatprep.subr.mxu0 0.0
  %322 = vmatpush1.msra.mxu0 0.0
  %323 = vmatprep.subr.mxu0 0.0
  %324 = vmatpush1.msra.mxu0 0.0
  %325 = vmatprep.subr.mxu0 0.0
  %326 = vmatpush1.msra.mxu0 0.0
  %327 = vmatprep.subr.mxu0 0.0
  %328 = vmatpush1.msra.mxu0 0.0
  %329 = vmatprep.subr.mxu0 0.0
  %330 = vmatpush1.msra.mxu0 0.0
  %331 = vmatprep.subr.mxu0 0.0
  %332 = vmatpush1.msra.mxu0 0.0
  %333 = vmatprep.subr.mxu0 0.0
  %334 = vmatpush1.msra.mxu0 0.0
  %335 = vmatprep.subr.mxu0 0.0
  %336 = vmatpush1.msra.mxu0 0.0
  %337 = vmatprep.subr.mxu0 0.0
  %338 = vmatpush1.msra.mxu0 0.0
  %339 = vmatprep.subr.mxu0 0.0
  %340 = vmatpush1.msra.mxu0 0.0
  %341 = vmatprep.subr.mxu0 0.0
  %342 = vmatpush1.msra.mxu0 0.0
  %343 = vmatprep.subr.mxu0 0.0
  %344 = vmatpush1.msra.mxu0 0.0
  %345 = vmatprep.subr.mxu0 0.0
  %346 = vmatpush1.msra.mxu0 0.0
  %347 = vmatprep.subr.mxu0 0.0
  %348 = vmatpush1.msra.mxu0 0.0
  %349 = vmatprep.subr.mxu0 0.0
  %350 = vmatpush1.msra.mxu0 0.0
  %351 = vmatprep.subr.mxu0 0.0
  %352 = vmatpush1.msra.mxu0 0.0
  %353 = vmatprep.subr.mxu0 0.0
  %354 = vmatpush1.msra.mxu0 0.0
  %355 = vmatprep.subr.mxu0 0.0
  %356 = vmatpush1.msra.mxu0 0.0
  %357 = vmatprep.subr.mxu0 0.0
  %358 = vmatpush1.msra.mxu0 0.0
  %359 = vmatprep.subr.mxu0 0.0
  %360 = vmatpush1.msra.mxu0 0.0
  %361 = vmatprep.subr.mxu0 0.0
  %362 = vmatpush1.msra.mxu0 0.0
  %363 = vmatprep.mubr.f32.mxu0 0.0
  %364 = vmatmul.mubr.f32.gmra.mrb[0].mxu0 %v216
  %v365 = vpop.f32.mrb[0].mxu0
  %v366 = vadd.f32 %v297, %v365
  %v367 = vpop.f32.mrb[0].mxu0
  %368 = vdwg.mxu0
  %v369 = vmax.f32 %v366, -20.0
  %v370 = vmin.f32 %v369, 2.0
  %vm371 = vcmask 31744
  %372 = vst.msk [vmem:[%s9] sm:$0xff] %vm371, %v285
  %v373 = vmul.f32 %v370, 1.442695
  %v374 = vpow.pop %v373
  %375 = vst.msk [vmem:[%s10] sm:$0xff] %vm371, %v374
  // Predicated region
  $region38: #{actor_forward.1} parent=0 // pred_check
    _
  $region39: #{actor_forward.1} parent=0 // pred_check_branch
    %377 = sbr.rel (0) target = $region41
  $region40: #{actor_forward.1} parent=0 // pred_region
    _
  $region41: #{actor_forward.1} parent=0 // pred_fallthru
    _
  // Predicated region
  $region42: #{actor_forward.1} parent=0 // pred_check
    _
  $region43: #{actor_forward.1} parent=0 // pred_check_branch
    %379 = sbr.rel (0) target = $region45
  $region44: #{actor_forward.1} parent=0 // pred_region
    _
  $region45: #{actor_forward.1} parent=0 // pred_fallthru
    _
  // Predicated region
  $region46: #{actor_forward.1} parent=0 // pred_check
    _
  $region47: #{actor_forward.1} parent=0 // pred_check_branch
    %381 = sbr.rel (0) target = $region49
  $region48: #{actor_forward.1} parent=0 // pred_region
    _
  $region49: #{actor_forward.1} parent=0 // pred_fallthru
    _
  // Predicated region
  $region50: #{actor_forward.1} parent=0 // pred_check
    _
  $region51: #{actor_forward.1} parent=0 // pred_check_branch
    %383 = sbr.rel (0) target = $region53
  $region52: #{actor_forward.1} parent=0 // pred_region
    _
  $region53: #{actor_forward.1} parent=0 // pred_fallthru
    _

</llo_original>
